<compile_context>
chip_gen: v5e
topology: v5e:2x2
jax: 0.10.0
libtpu: 0.0.40
codegen_flags: <defaults>
</compile_context>

<pallas_src>
import jax
import jax.numpy as jnp
from jax.experimental import pallas as pl
from jax.experimental.pallas import tpu as pltpu


def _solarize_kernel(x_ref, t_ref, o_ref):
    # x_ref: (TILE_B, TILE_F) VMEM tile, t_ref: (TILE_B, 1) VMEM tile.
    x = x_ref[...]
    t = t_ref[...]                       # (TILE_B, 1) broadcasts over lanes
    y = jnp.where(x < t, x, 1.0 - x)
    o_ref[...] = jnp.clip(y, 0.0, 1.0)


def _round_up(n, m):
    return ((n + m - 1) // m) * m


def solarize(x, thresholds, *, tile_b=8, max_tile_f=32768):
    """x: (B, C, H, W) float32, thresholds: (B, 1) float32."""
    B, C, H, W = x.shape
    F = C * H * W

    x_flat = x.reshape(B, F)
    thr = thresholds.reshape(B, 1).astype(x.dtype)

    # Pick a lane-dense feature tile (multiple of 128, <= max_tile_f) and pad
    # both axes so every block is full -> unmasked stores, no OOB reads.
    tile_f = min(_round_up(F, 128), max_tile_f)
    B_pad = _round_up(B, tile_b)
    F_pad = _round_up(F, tile_f)

    if B_pad != B or F_pad != F:
        x_flat = jnp.pad(x_flat, ((0, B_pad - B), (0, F_pad - F)))
    if B_pad != B:
        thr = jnp.pad(thr, ((0, B_pad - B), (0, 0)))

    grid = (B_pad // tile_b, F_pad // tile_f)
    itemsize = jnp.dtype(x.dtype).itemsize

    out_flat = pl.pallas_call(
        _solarize_kernel,
        out_shape=jax.ShapeDtypeStruct((B_pad, F_pad), x.dtype),
        grid_spec=pltpu.PrefetchScalarGridSpec(
            num_scalar_prefetch=0,
            grid=grid,
            in_specs=[
                # Streaming input tiles over (batch-tile, feature-tile).
                pl.BlockSpec((tile_b, tile_f), lambda i, j: (i, j)),
                # Threshold: constant across the (inner) feature axis -> no
                # per-step re-DMA.
                pl.BlockSpec((tile_b, 1), lambda i, j: (i, 0)),
            ],
            out_specs=pl.BlockSpec((tile_b, tile_f), lambda i, j: (i, j)),
        ),
        compiler_params=pltpu.CompilerParams(
            dimension_semantics=("parallel", "parallel")),
        cost_estimate=pl.CostEstimate(
            flops=3 * B_pad * F_pad,
            transcendentals=0,
            bytes_accessed=2 * B_pad * F_pad * itemsize + B_pad * itemsize),
    )(x_flat, thr)

    return out_flat[:B, :F].reshape(B, C, H, W)


def solarize_ref(x, thresholds):
    B = x.shape[0]
    flat = x.reshape(B, -1)
    out = jnp.where(flat < thresholds, flat, 1.0 - flat)
    return jnp.clip(out.reshape(x.shape), 0.0, 1.0)


if __name__ == "__main__":
    key = jax.random.PRNGKey(0)
    B, C, H, W = 2, 4, 16, 16
    x = jax.random.uniform(key, (B, C, H, W), dtype=jnp.float32)
    # Deterministic per-sample thresholds, shape (B, 1) as implied by the
    # backward's per-row-sum threshold gradient.
    thresholds = jnp.array([[0.5], [0.25]], dtype=jnp.float32)

    out = solarize(x, thresholds)
    jax.block_until_ready(out)

    ref = solarize_ref(x, thresholds)
    assert out.shape == (B, C, H, W)
    assert jnp.allclose(out, ref, atol=1e-6), "mismatch vs reference"
    print("KERNEL_OK")
</pallas_src>

<mosaic_0001>
module attributes {stable_mosaic.version = 11 : i64} {
  func.func @_solarize_kernel(%arg0: i32, %arg1: i32, %arg2: memref<8x1024xf32, #tpu.memory_space<vmem>>, %arg3: memref<8x1xf32, #tpu.memory_space<vmem>>, %arg4: memref<8x1024xf32, #tpu.memory_space<vmem>>) attributes {dimension_semantics = [#tpu.dimension_semantics<parallel>, #tpu.dimension_semantics<parallel>], iteration_bounds = array<i64: 1, 1>, scalar_prefetch = 0 : i64, scratch_operands = 0 : i64, tpu.core_type = #tpu.core_type<tc>, window_params = [{transform_indices = @transform_0, window_bounds = array<i64: 8, 1024>}, {transform_indices = @transform_1, window_bounds = array<i64: 8, 1>}, {transform_indices = @transform_2, window_bounds = array<i64: 8, 1024>}]} {
    %c0 = arith.constant 0 : index
    %c0_0 = arith.constant 0 : index
    %0 = vector.load %arg2[%c0, %c0_0] : memref<8x1024xf32, #tpu.memory_space<vmem>>, vector<8x1024xf32>
    %c0_1 = arith.constant 0 : index
    %c0_2 = arith.constant 0 : index
    %1 = vector.load %arg3[%c0_1, %c0_2] : memref<8x1xf32, #tpu.memory_space<vmem>>, vector<8x1xf32>
    %2 = vector.broadcast %1 : vector<8x1xf32> to vector<8x1024xf32>
    %3 = arith.cmpf olt, %0, %2 : vector<8x1024xf32>
    %cst = arith.constant 1.000000e+00 : f32
    %4 = vector.broadcast %cst : f32 to vector<8x1024xf32>
    %5 = arith.subf %4, %0 : vector<8x1024xf32>
    %6 = arith.select %3, %0, %5 : vector<8x1024xi1>, vector<8x1024xf32>
    %cst_3 = arith.constant 0.000000e+00 : f32
    %cst_4 = arith.constant 1.000000e+00 : f32
    %7 = vector.broadcast %cst_3 : f32 to vector<8x1024xf32>
    %8 = arith.maximumf %7, %6 : vector<8x1024xf32>
    %9 = vector.broadcast %cst_4 : f32 to vector<8x1024xf32>
    %10 = arith.minimumf %9, %8 : vector<8x1024xf32>
    %c0_5 = arith.constant 0 : index
    %c0_6 = arith.constant 0 : index
    %11 = vector.load %arg4[%c0_5, %c0_6] : memref<8x1024xf32, #tpu.memory_space<vmem>>, vector<8x1024xf32>
    tpu.vector_store %arg4[%c0_5, %c0_6], %10 {strides = array<i32>} : memref<8x1024xf32, #tpu.memory_space<vmem>>, vector<8x1024xf32>,
    return
  }
  func.func @transform_0(%arg0: i32, %arg1: i32) -> (i32, i32) {
    %c0_i32 = arith.constant 0 : i32
    return %arg0, %arg1 : i32, i32
  }
  func.func @transform_1(%arg0: i32, %arg1: i32) -> (i32, i32) {
    %c0_i32 = arith.constant 0 : i32
    %c0_i32_0 = arith.constant 0 : i32
    return %arg0, %c0_i32 : i32, i32
  }
  func.func @transform_2(%arg0: i32, %arg1: i32) -> (i32, i32) {
    %c0_i32 = arith.constant 0 : i32
    return %arg0, %arg1 : i32, i32
  }
}

</mosaic_0001>

<llo_original>
// kernel: tpu_custom_call.1
$region0: #{tpu_custom_call.1}
  #allocation0 [shape = 'u32[]', space=smem, size = 0x4, offset = 0x4, fixed_abs, tag = 'smem constant byte address 0x4 - core index']
  #allocation1 [shape = 'u32[72,128]{1,0:T(1,128)}', space=vmem, size = 0x9000, scoped, tag = 'internal scratch']
  %s0 = inlined_call_operand.hbm [shape: f32[8,1024], index: 0, kind: input, shape index: {}]
  %s1 = inlined_call_operand.vmem [shape: f32[8,1], index: 1, kind: input, shape index: {}]
  %s2 = inlined_call_operand.hbm [shape: f32[8,1024], index: 2, kind: output, shape index: {}]
  %s3 = sld [smem:[#allocation0]]
  $region22: #{tpu_custom_call.1} parent=0
    _
  %s5 = ssub.s32 1, %s3
  %s6 = scalar_select 0, %s5, %s3
  $region1: #{tpu_custom_call.1} parent=0
    #allocation2 [shape = 'u8[32768]{0}', space=vmem, size = 0x8000, scoped, tag = 'input window, operand 0, single buffered']
    #allocation3 [shape = 's32[1]{0}', space=sflag, size = 0x4, scoped, tag = 'scoped memory for tpu_custom_call.1']
    #allocation4 [shape = 's32[1]{0}', space=sflag, size = 0x4, scoped, tag = 'scoped memory for tpu_custom_call.1']
    #allocation5 [shape = 'u8[32768]{0}', space=vmem, size = 0x8000, scoped, tag = 'output window, operand 0, single buffered']
    %7 = vsyncpa [#allocation3], 0
    %8 = vsyncpa [#allocation4], 0
    // Predicated region
    $region2: #{tpu_custom_call.1} parent=1 // pred_check
      _
    $region3: #{tpu_custom_call.1} parent=1 // pred_check_branch
      %10 = sbr.rel (0) target = $region5
    $region4: #{tpu_custom_call.1} parent=1 // pred_region
      %12 = vsyncadd [#allocation3], 0
      %s14 = sshll.u32 %s0, 4
      %s15 = int_to_ptr.hbm [resolvable:$true] %s14
      %s16 = sshll.u32 [#allocation2], 4
      %s17 = int_to_ptr.vmem [resolvable:$true] %s16
      %19 = dma.hbm_to_vmem [thread:$0]  %s15, 1024, %s17, [#allocation3]
    $region5: #{tpu_custom_call.1} parent=1 // pred_fallthru
      _
    // Predicated region
    $region6: #{tpu_custom_call.1} parent=1 // pred_check
      _
    $region7: #{tpu_custom_call.1} parent=1 // pred_check_branch
      %21 = sbr.rel (0) target = $region9
    $region8: #{tpu_custom_call.1} parent=1 // pred_region
      _
    $region9: #{tpu_custom_call.1} parent=1 // pred_fallthru
      _
    // Predicated region
    $region10: #{tpu_custom_call.1} parent=1 // pred_check
      _
    $region11: #{tpu_custom_call.1} parent=1 // pred_check_branch
      %23 = sbr.rel (0) target = $region13
    $region12: #{tpu_custom_call.1} parent=1 // pred_region
      %25 = dma.done [#allocation3], 1024
    $region13: #{tpu_custom_call.1} parent=1 // pred_fallthru
      _
    %v26 = vld [vmem:[#allocation2] sm:$0xff]
    %v27 = vld [vmem:[#allocation2 + $0x8] sm:$0xff]
    %v28 = vld [vmem:[#allocation2 + $0x10] sm:$0xff]
    %v29 = vld [vmem:[#allocation2 + $0x18] sm:$0xff]
    %v30 = vld [vmem:[#allocation2 + $0x20] sm:$0xff]
    %v31 = vld [vmem:[#allocation2 + $0x28] sm:$0xff]
    %v32 = vld [vmem:[#allocation2 + $0x30] sm:$0xff]
    %v33 = vld [vmem:[#allocation2 + $0x38] sm:$0xff]
    %v34 = vld [vmem:[%s1] sm:$0xff]
    %36 = vset.pattern.permute.xlu0 0
    %37 = vperm.xlu0 %36, %v34
    %v38 = vpop.permute.xlu0 %37
    %vm40 = vcmp.lt.f32.partialorder %v26, %v38
    %vm41 = vcmp.lt.f32.partialorder %v27, %v38
    %vm42 = vcmp.lt.f32.partialorder %v28, %v38
    %vm43 = vcmp.lt.f32.partialorder %v29, %v38
    %vm44 = vcmp.lt.f32.partialorder %v30, %v38
    %vm45 = vcmp.lt.f32.partialorder %v31, %v38
    %vm46 = vcmp.lt.f32.partialorder %v32, %v38
    %vm47 = vcmp.lt.f32.partialorder %v33, %v38
    %v48 = vsub.f32 1.0, %v26
    %v49 = vsub.f32 1.0, %v27
    %v50 = vsub.f32 1.0, %v28
    %v51 = vsub.f32 1.0, %v29
    %v52 = vsub.f32 1.0, %v30
    %v53 = vsub.f32 1.0, %v31
    %v54 = vsub.f32 1.0, %v32
    %v55 = vsub.f32 1.0, %v33
    %v56 = vsel %vm40, %v26, %v48
    %v57 = vsel %vm41, %v27, %v49
    %v58 = vsel %vm42, %v28, %v50
    %v59 = vsel %vm43, %v29, %v51
    %v60 = vsel %vm44, %v30, %v52
    %v61 = vsel %vm45, %v31, %v53
    %v62 = vsel %vm46, %v32, %v54
    %v63 = vsel %vm47, %v33, %v55
    %v64 = vmax.f32 %v56, 0.0
    %v65 = vmax.f32 %v57, 0.0
    %v66 = vmax.f32 %v58, 0.0
    %v67 = vmax.f32 %v59, 0.0
    %v68 = vmax.f32 %v60, 0.0
    %v69 = vmax.f32 %v61, 0.0
    %v70 = vmax.f32 %v62, 0.0
    %v71 = vmax.f32 %v63, 0.0
    %v72 = vmin.f32 %v64, 1.0
    %v73 = vmin.f32 %v65, 1.0
    %v74 = vmin.f32 %v66, 1.0
    %v75 = vmin.f32 %v67, 1.0
    %v76 = vmin.f32 %v68, 1.0
    %v77 = vmin.f32 %v69, 1.0
    %v78 = vmin.f32 %v70, 1.0
    %v79 = vmin.f32 %v71, 1.0
    %80 = vst [vmem:[#allocation5] sm:$0xff] %v72
    %81 = vst [vmem:[#allocation5 + $0x8] sm:$0xff] %v73
    %82 = vst [vmem:[#allocation5 + $0x10] sm:$0xff] %v74
    %83 = vst [vmem:[#allocation5 + $0x18] sm:$0xff] %v75
    %84 = vst [vmem:[#allocation5 + $0x20] sm:$0xff] %v76
    %85 = vst [vmem:[#allocation5 + $0x28] sm:$0xff] %v77
    %86 = vst [vmem:[#allocation5 + $0x30] sm:$0xff] %v78
    %87 = vst [vmem:[#allocation5 + $0x38] sm:$0xff] %v79
    // Predicated region
    $region14: #{tpu_custom_call.1} parent=1 // pred_check
      _
    $region15: #{tpu_custom_call.1} parent=1 // pred_check_branch
      %89 = sbr.rel (0) target = $region17
    $region16: #{tpu_custom_call.1} parent=1 // pred_region
      %91 = vsyncadd [#allocation4], 0
      %s93 = sshll.u32 [#allocation5], 4
      %s94 = int_to_ptr.vmem [resolvable:$true] %s93
      %s95 = sshll.u32 %s2, 4
      %s96 = int_to_ptr.hbm [resolvable:$true] %s95
      %98 = dma.vmem_to_hbm [thread:$0]  %s94, 1024, %s96, [#allocation4]
    $region17: #{tpu_custom_call.1} parent=1 // pred_fallthru
      _
    // Predicated region
    $region18: #{tpu_custom_call.1} parent=1 // pred_check
      _
    $region19: #{tpu_custom_call.1} parent=1 // pred_check_branch
      %100 = sbr.rel (0) target = $region21
    $region20: #{tpu_custom_call.1} parent=1 // pred_region
      %102 = dma.done [#allocation4], 1024
    $region21: #{tpu_custom_call.1} parent=1 // pred_fallthru
      _
    %103 = vsyncpa [#allocation3], 1
    %104 = vsyncpa [#allocation4], 1

</llo_original>
